<compile_context>
chip_gen: v7x
topology: tpu7x:2x2x1
jax: 0.10.0
libtpu: 0.0.40
codegen_flags: <defaults>
</compile_context>

<pallas_src>
import functools

import jax
import jax.numpy as jnp
from jax.experimental import pallas as pl
from jax.experimental.pallas import tpu as pltpu


# ---------------------------------------------------------------------------
# Kernels
# ---------------------------------------------------------------------------

def _se_kernel(x_ref, w1t_ref, w2t_ref, o_ref, *, inv_hw):
    # x_ref / o_ref: (NB, HW, C)  channels-last block (C on lanes)
    # w1t_ref:       (C, S)       squeeze 1x1-conv weight, pre-transposed
    # w2t_ref:       (S, C)       excite 1x1-conv weight, pre-transposed

    # --- squeeze: global average pool over HW (sublane axis), f32 accumulate ---
    pooled = jnp.sum(x_ref[...], axis=1, dtype=jnp.float32) * inv_hw        # (NB, C)

    # --- 1x1 conv C -> S (no bias) + Swish ---
    sq = jnp.dot(pooled, w1t_ref[...].astype(jnp.float32),
                 preferred_element_type=jnp.float32)                        # (NB, S)
    sq = sq * jax.nn.sigmoid(sq)

    # --- 1x1 conv S -> C (no bias) + sigmoid gate ---
    ex = jnp.dot(sq, w2t_ref[...].astype(jnp.float32),
                 preferred_element_type=jnp.float32)                        # (NB, C)
    gate = jax.nn.sigmoid(ex)                                               # (NB, C) f32

    # --- apply gate in the I/O dtype (no full-tile f32 upcast); gate is tiny ---
    if o_ref.dtype != jnp.float32:
        gate = gate.astype(o_ref.dtype)
    o_ref[...] = (x_ref[...] * gate[:, None, :]).astype(o_ref.dtype)


def _pool_kernel(x_ref, pooled_ref, *, hw_total, inv_hw):
    # Fallback pass 1: accumulate the spatial mean across HW tiles.
    # x_ref: (NB, HW_BLK, C); pooled_ref: (NB, 1, C) f32, resident across the HW axis.
    h = pl.program_id(1)

    @pl.when(h == 0)
    def _():
        pooled_ref[...] = jnp.zeros_like(pooled_ref)

    hw_blk = x_ref.shape[1]
    pos = h * hw_blk + jax.lax.broadcasted_iota(jnp.int32, (1, hw_blk, 1), 1)
    xs = jnp.where(pos < hw_total, x_ref[...], jnp.zeros((), x_ref.dtype))
    pooled_ref[...] += jnp.sum(xs, axis=1, keepdims=True, dtype=jnp.float32)

    @pl.when(h == pl.num_programs(1) - 1)
    def _():
        pooled_ref[...] = pooled_ref[...] * inv_hw


def _gate_kernel(pooled_ref, w1t_ref, w2t_ref, x_ref, o_ref):
    # Fallback pass 2: excite (tiny matmuls, recomputed per HW tile) + gate.
    pooled = pooled_ref[...].reshape(pooled_ref.shape[0], pooled_ref.shape[2])  # (NB, C) f32
    sq = jnp.dot(pooled, w1t_ref[...].astype(jnp.float32),
                 preferred_element_type=jnp.float32)
    sq = sq * jax.nn.sigmoid(sq)
    ex = jnp.dot(sq, w2t_ref[...].astype(jnp.float32),
                 preferred_element_type=jnp.float32)
    gate = jax.nn.sigmoid(ex)
    if o_ref.dtype != jnp.float32:
        gate = gate.astype(o_ref.dtype)
    o_ref[...] = (x_ref[...] * gate[:, None, :]).astype(o_ref.dtype)


# ---------------------------------------------------------------------------
# Wrappers
# ---------------------------------------------------------------------------

def _vmem_capacity_bytes():
    try:
        return int(pltpu.get_tpu_info().vmem_capacity_bytes)
    except Exception:
        return 64 << 20   # conservative (v7x-sized) fallback


def _se_two_pass(x_nhwc, w1t, w2t, *, hw_block, vmem_limit_bytes):
    """Fallback for samples whose (HW, C) slab exceeds the block budget."""
    N, HW, C = x_nhwc.shape
    S = w1t.shape[1]
    grid_hw = pl.cdiv(HW, hw_block)
    inv_hw = 1.0 / float(HW)

    pooled = pl.pallas_call(
        functools.partial(_pool_kernel, hw_total=HW, inv_hw=inv_hw),
        out_shape=jax.ShapeDtypeStruct((N, 1, C), jnp.float32),
        grid_spec=pltpu.PrefetchScalarGridSpec(
            num_scalar_prefetch=0,
            grid=(N, grid_hw),
            in_specs=[pl.BlockSpec((1, hw_block, C), lambda n, h: (n, h, 0))],
            out_specs=pl.BlockSpec((1, 1, C), lambda n, h: (n, 0, 0)),
        ),
        compiler_params=pltpu.CompilerParams(
            dimension_semantics=("parallel", "arbitrary"),
            vmem_limit_bytes=vmem_limit_bytes,
        ),
    )(x_nhwc)

    out = pl.pallas_call(
        _gate_kernel,
        out_shape=jax.ShapeDtypeStruct((N, HW, C), x_nhwc.dtype),
        grid_spec=pltpu.PrefetchScalarGridSpec(
            num_scalar_prefetch=0,
            grid=(N, grid_hw),
            in_specs=[
                pl.BlockSpec((1, 1, C), lambda n, h: (n, 0, 0)),
                pl.BlockSpec((C, S), lambda n, h: (0, 0)),
                pl.BlockSpec((S, C), lambda n, h: (0, 0)),
                pl.BlockSpec((1, hw_block, C), lambda n, h: (n, h, 0)),
            ],
            out_specs=pl.BlockSpec((1, hw_block, C), lambda n, h: (n, h, 0)),
        ),
        compiler_params=pltpu.CompilerParams(
            dimension_semantics=("parallel", "parallel"),
            vmem_limit_bytes=vmem_limit_bytes,
        ),
    )(pooled, w1t, w2t, x_nhwc)
    return out


def se_module_nhwc(x_nhwc, w1, w2, *,
                   block_bytes_budget=None, vmem_limit_bytes=None):
    """Channels-last SE forward.

    x_nhwc: (N, HW, C);  w1: (S, C) squeeze 1x1-conv;  w2: (C, S) excite 1x1-conv.
    Returns (N, HW, C) in x's dtype.  Pass bf16 x to halve HBM traffic; pool /
    matmul / sigmoid accumulation stays f32.
    """
    N, HW, C = x_nhwc.shape
    S = w1.shape[0]
    itemsize = jnp.dtype(x_nhwc.dtype).itemsize

    # Generation-aware VMEM budgets (v7x: 64 MiB physical, v5e/v6e: 128 MiB).
    vmem_cap = _vmem_capacity_bytes()
    if block_bytes_budget is None:
        block_bytes_budget = max(512 * 1024, vmem_cap // 12)
    if vmem_limit_bytes is None:
        vmem_limit_bytes = min(vmem_cap * 5 // 8, 80 << 20)

    # Pre-transpose the 1x1-conv weights once (cheap; avoids in-kernel XLU work).
    w1t = jnp.transpose(w1)   # (C, S)
    w2t = jnp.transpose(w2)   # (S, C)

    per_sample_bytes = HW * C * itemsize
    if per_sample_bytes > block_bytes_budget:
        # Single sample doesn't fit the budget: tile HW in a two-pass pipeline.
        hw_block = max(8, (block_bytes_budget // max(C * itemsize, 1)) // 8 * 8)
        hw_block = min(hw_block, HW)
        return _se_two_pass(x_nhwc, w1t, w2t,
                            hw_block=hw_block, vmem_limit_bytes=vmem_limit_bytes)

    # Batch tiling: biggest NB under the budget; cdiv grid handles awkward N
    # (padded tail samples are independent, padded writes discarded); cap NB so
    # multi-TensorCore parts (v7x) get >= 2 grid steps.
    max_nb = max(1, block_bytes_budget // per_sample_bytes)
    nb = min(max_nb, N)
    if N >= 2:
        nb = min(nb, max(1, N // 2))
    grid = (pl.cdiv(N, nb),)

    kernel = functools.partial(_se_kernel, inv_hw=1.0 / float(HW))

    cost = pl.CostEstimate(
        flops=int(2 * N * C * HW + 4 * N * C * S),
        transcendentals=int(N * (S + C)),
        bytes_accessed=int(2 * N * HW * C * itemsize
                           + (w1.size + w2.size) * jnp.dtype(w1.dtype).itemsize),
    )

    return pl.pallas_call(
        kernel,
        out_shape=jax.ShapeDtypeStruct((N, HW, C), x_nhwc.dtype),
        grid_spec=pltpu.PrefetchScalarGridSpec(
            num_scalar_prefetch=0,
            grid=grid,
            in_specs=[
                pl.BlockSpec((nb, HW, C), lambda n: (n, 0, 0)),
                pl.BlockSpec((C, S), lambda n: (0, 0)),
                pl.BlockSpec((S, C), lambda n: (0, 0)),
            ],
            out_specs=pl.BlockSpec((nb, HW, C), lambda n: (n, 0, 0)),
        ),
        compiler_params=pltpu.CompilerParams(
            dimension_semantics=("parallel",),
            vmem_limit_bytes=vmem_limit_bytes,
        ),
        cost_estimate=cost,
    )(x_nhwc, w1t, w2t)


def se_module(x_nchw, w1, w2, **kwargs):
    """PyTorch-interface SE forward: x_nchw (N, C, H, W) -> (N, C, H, W).

    Internally runs the channels-last kernel; the NCHW<->NHWC transposes here
    are layout plumbing to match the PyTorch module — callers that already hold
    channels-last activations should use se_module_nhwc directly.
    """
    N, C, H, W = x_nchw.shape
    x_nhwc = jnp.transpose(x_nchw, (0, 2, 3, 1)).reshape(N, H * W, C)
    out = se_module_nhwc(x_nhwc, w1, w2, **kwargs)
    return jnp.transpose(out.reshape(N, H, W, C), (0, 3, 1, 2))


def se_module_ref(x, w1, w2):
    # Pure-JAX reference matching PyTorch SEModule semantics (NCHW).
    pooled = jnp.mean(x, axis=(2, 3))                        # (N, C)
    sq = pooled @ w1.T                                       # (N, S)
    sq = sq * jax.nn.sigmoid(sq)                             # Swish
    ex = sq @ w2.T                                           # (N, C)
    gate = jax.nn.sigmoid(ex)[:, :, None, None]              # (N, C, 1, 1)
    return x * gate


if __name__ == "__main__":
    N, C, H, W = 2, 4, 16, 16
    S = 2  # squeeze_channels

    key = jax.random.PRNGKey(0)
    kx, k1, k2 = jax.random.split(key, 3)
    x = jax.random.normal(kx, (N, C, H, W), dtype=jnp.float32)
    # Conv2d 1x1 weights (kernel_size=1 => effectively (out, in)), no bias.
    w1 = jax.random.normal(k1, (S, C), dtype=jnp.float32) * 0.1   # squeeze conv
    w2 = jax.random.normal(k2, (C, S), dtype=jnp.float32) * 0.1   # excite conv

    ref = se_module_ref(x, w1, w2)

    # Primary fused path (f32 I/O).
    out = jax.block_until_ready(se_module(x, w1, w2))
    assert out.shape == ref.shape and out.dtype == ref.dtype
    assert jnp.allclose(out, ref, atol=1e-5, rtol=1e-5), "mismatch vs reference (fused)"

    # Oversized-sample fallback path (force a tiny budget so one sample > budget).
    out_fb = jax.block_until_ready(se_module(x, w1, w2, block_bytes_budget=2048))
    assert jnp.allclose(out_fb, ref, atol=1e-5, rtol=1e-5), "mismatch vs reference (fallback)"

    # bf16 I/O path (f32 accumulation inside the kernel); looser tolerance.
    x_bf = x.astype(jnp.bfloat16)
    ref_bf = se_module_ref(x_bf.astype(jnp.float32), w1, w2)
    out_bf = jax.block_until_ready(se_module(x_bf, w1, w2))
    assert out_bf.dtype == jnp.bfloat16
    assert jnp.allclose(out_bf.astype(jnp.float32), ref_bf, atol=5e-2, rtol=5e-2), \
        "mismatch vs reference (bf16)"

    print("KERNEL_OK")
</pallas_src>

<mosaic_0001>
module attributes {stable_mosaic.version = 11 : i64} {
  func.func @_se_kernel(%arg0: i32, %arg1: memref<1x256x4xf32, #tpu.memory_space<vmem>>, %arg2: memref<4x2xf32, #tpu.memory_space<vmem>>, %arg3: memref<2x4xf32, #tpu.memory_space<vmem>>, %arg4: memref<1x256x4xf32, #tpu.memory_space<vmem>>) attributes {dimension_semantics = [#tpu.dimension_semantics<parallel>], iteration_bounds = array<i64: 2>, scalar_prefetch = 0 : i64, scratch_operands = 0 : i64, tpu.core_type = #tpu.core_type<tc>, window_params = [{transform_indices = @transform_0, window_bounds = array<i64: 1, 256, 4>}, {pipeline_mode = #tpu.pipeline_mode<synchronous>, transform_indices = @transform_1, window_bounds = array<i64: 4, 2>}, {pipeline_mode = #tpu.pipeline_mode<synchronous>, transform_indices = @transform_2, window_bounds = array<i64: 2, 4>}, {transform_indices = @transform_3, window_bounds = array<i64: 1, 256, 4>}]} {
    %c0 = arith.constant 0 : index
    %c0_0 = arith.constant 0 : index
    %c0_1 = arith.constant 0 : index
    %0 = vector.load %arg1[%c0, %c0_0, %c0_1] : memref<1x256x4xf32, #tpu.memory_space<vmem>>, vector<1x256x4xf32>
    %cst = arith.constant dense<0.000000e+00> : vector<1x4xf32>
    %1 = vector.multi_reduction <add>, %0, %cst [1] : vector<1x256x4xf32> to vector<1x4xf32>
    %cst_2 = arith.constant 3.906250e-03 : f32
    %2 = vector.broadcast %cst_2 : f32 to vector<1x4xf32>
    %3 = arith.mulf %1, %2 : vector<1x4xf32>
    %c0_3 = arith.constant 0 : index
    %c0_4 = arith.constant 0 : index
    %4 = vector.load %arg2[%c0_3, %c0_4] : memref<4x2xf32, #tpu.memory_space<vmem>>, vector<4x2xf32>
    %cst_5 = arith.constant dense<0.000000e+00> : vector<1x2xf32>
    %5 = tpu.matmul %3, %4, %cst_5 {dimension_numbers = #tpu.dot_dimension_numbers<[1], [0], [0], [1], [0, 0, 1, 1], [], []>} : vector<1x4xf32>, vector<4x2xf32>, vector<1x2xf32> -> vector<1x2xf32>
    %6 = arith.negf %5 : vector<1x2xf32>
    %7 = math.exp %6 : vector<1x2xf32>
    %cst_6 = arith.constant 1.000000e+00 : f32
    %8 = vector.broadcast %cst_6 : f32 to vector<1x2xf32>
    %9 = arith.addf %8, %7 : vector<1x2xf32>
    %10 = arith.divf %8, %9 : vector<1x2xf32>
    %11 = arith.mulf %5, %10 : vector<1x2xf32>
    %c0_7 = arith.constant 0 : index
    %c0_8 = arith.constant 0 : index
    %12 = vector.load %arg3[%c0_7, %c0_8] : memref<2x4xf32, #tpu.memory_space<vmem>>, vector<2x4xf32>
    %cst_9 = arith.constant dense<0.000000e+00> : vector<1x4xf32>
    %13 = tpu.matmul %11, %12, %cst_9 {dimension_numbers = #tpu.dot_dimension_numbers<[1], [0], [0], [1], [0, 0, 1, 1], [], []>} : vector<1x2xf32>, vector<2x4xf32>, vector<1x4xf32> -> vector<1x4xf32>
    %14 = arith.negf %13 : vector<1x4xf32>
    %15 = math.exp %14 : vector<1x4xf32>
    %cst_10 = arith.constant 1.000000e+00 : f32
    %16 = vector.broadcast %cst_10 : f32 to vector<1x4xf32>
    %17 = arith.addf %16, %15 : vector<1x4xf32>
    %18 = arith.divf %16, %17 : vector<1x4xf32>
    %c0_11 = arith.constant 0 : index
    %c0_12 = arith.constant 0 : index
    %c0_13 = arith.constant 0 : index
    %19 = vector.load %arg1[%c0_11, %c0_12, %c0_13] : memref<1x256x4xf32, #tpu.memory_space<vmem>>, vector<1x256x4xf32>
    %20 = vector.shape_cast %18 : vector<1x4xf32> to vector<1x1x4xf32>
    %21 = vector.broadcast %20 : vector<1x1x4xf32> to vector<1x256x4xf32>
    %22 = arith.mulf %19, %21 : vector<1x256x4xf32>
    %c0_14 = arith.constant 0 : index
    %c0_15 = arith.constant 0 : index
    %c0_16 = arith.constant 0 : index
    %23 = vector.load %arg4[%c0_14, %c0_15, %c0_16] : memref<1x256x4xf32, #tpu.memory_space<vmem>>, vector<1x256x4xf32>
    tpu.vector_store %arg4[%c0_14, %c0_15, %c0_16], %22 {strides = array<i32>} : memref<1x256x4xf32, #tpu.memory_space<vmem>>, vector<1x256x4xf32>,
    return
  }
  func.func @transform_0(%arg0: i32) -> (i32, i32, i32) {
    %c0_i32 = arith.constant 0 : i32
    %c0_i32_0 = arith.constant 0 : i32
    %c0_i32_1 = arith.constant 0 : i32
    return %arg0, %c0_i32, %c0_i32_0 : i32, i32, i32
  }
  func.func @transform_1(%arg0: i32) -> (i32, i32) {
    %c0_i32 = arith.constant 0 : i32
    %c0_i32_0 = arith.constant 0 : i32
    %c0_i32_1 = arith.constant 0 : i32
    return %c0_i32, %c0_i32_0 : i32, i32
  }
  func.func @transform_2(%arg0: i32) -> (i32, i32) {
    %c0_i32 = arith.constant 0 : i32
    %c0_i32_0 = arith.constant 0 : i32
    %c0_i32_1 = arith.constant 0 : i32
    return %c0_i32, %c0_i32_0 : i32, i32
  }
  func.func @transform_3(%arg0: i32) -> (i32, i32, i32) {
    %c0_i32 = arith.constant 0 : i32
    %c0_i32_0 = arith.constant 0 : i32
    %c0_i32_1 = arith.constant 0 : i32
    return %arg0, %c0_i32, %c0_i32_0 : i32, i32, i32
  }
}

</mosaic_0001>

<llo_original>
// kernel: tpu_custom_call.1
$region0: #{tpu_custom_call.1}
  #allocation0 [shape = 'u32[]', space=smem, size = 0x4, offset = 0x4, fixed_abs, tag = 'smem constant byte address 0x4 - core index']
  #allocation1 [shape = 'u32[144,128]{1,0:T(1,128)}', space=vmem, size = 0x12000, scoped, tag = 'internal scratch']
  %s0 = inlined_call_operand.vmem [shape: f32[2,256,4], index: 0, kind: input, shape index: {}]
  %s1 = inlined_call_operand.vmem [shape: f32[4,2], index: 1, kind: input, shape index: {}]
  %s2 = inlined_call_operand.vmem [shape: f32[2,4], index: 2, kind: input, shape index: {}]
  %s3 = inlined_call_operand.vmem [shape: f32[2,256,4], index: 3, kind: output, shape index: {}]
  %s4 = sld [smem:[#allocation0]]
  $region45: #{tpu_custom_call.1} parent=0
    _
  %s6 = ssub.s32 1, %s4
  %s7 = scalar_select 0, %s6, %s4
  loop: start=0, step=1, limit=4
  $region2: #{tpu_custom_call.1} parent=0 // loop_pre_header
    _
  $region3: #{tpu_custom_call.1} parent=0 // loop_header
    %s9 = sphi 0, %s13
    %p10 = scmp.ge.s32.totalorder %s9, 4
    %s19 = sphi 0, %s21
    %s22 = sphi 0, %s19
    %s23 = sphi 0, %s22
    %s39 = sphi 0, %s23
    %s43 = sphi 0, %s43
    %s45 = sphi 0, %s43
    %s46 = sphi 0, %s45
    %s60 = sphi 0, %s46
    %s64 = sphi 0, %s64
    %s66 = sphi 0, %s64
    %s67 = sphi 0, %s66
    %s81 = sphi 0, %s67
    %s87 = sphi 0, %s89
    %s90 = sphi 0, %s87
    %s91 = sphi 0, %s90
    %s107 = sphi 0, %s91
  $region4: #{tpu_custom_call.1} parent=0 // loop_header_branch
    %12 = sbr.rel (%p10) target = $region8
  $region5: #{tpu_custom_call.1} parent=0 // loop_body
    %s14 = ssub.s32 %s9, 1
    %s15 = ssub.s32 %s9, 2
    %s16 = sadd.s32 %s9, 1
    %s17 = ssub.s32 %s9, %s16
    %p18 = scmp.eq.s32.totalorder %s17, 0
    %s20 = sadd.s32 %s19, 1
    %s21 = scalar_select %p18, %s19, %s20
    %p24 = pneg %p18
    %p25 = scmp.eq.s32.totalorder %s9, 1
    %p26 = por %p24, %p25
    %p27 = scmp.ne.s32.totalorder %s19, %s22
    %p28 = scmp.eq.s32.totalorder %s9, 0
    %p29 = por %p27, %p28
    %p30 = scmp.ne.s32.totalorder %s19, %s22
    %p31 = scmp.eq.s32.totalorder %s14, 1
    %p32 = por %p30, %p31
    %p33 = scmp.ne.s32.totalorder %s22, %s23
    %p34 = scmp.eq.s32.totalorder %s14, 0
    %p35 = por %p33, %p34
    %p36 = scmp.ne.s32.totalorder %s22, %s23
    %p37 = scmp.eq.s32.totalorder %s15, 1
    %p38 = por %p36, %p37
    %p40 = scmp.ne.s32.totalorder %s23, %s39
    %p41 = scmp.eq.s32.totalorder %s15, 0
    %p42 = por %p40, %p41
    %s44 = sadd.s32 %s43, 1
    %p47 = scmp.eq.s32.totalorder %s9, 1
    %p48 = scmp.ne.s32.totalorder %s43, %s45
    %p49 = scmp.eq.s32.totalorder %s9, 0
    %p50 = por %p48, %p49
    %p51 = scmp.ne.s32.totalorder %s43, %s45
    %p52 = scmp.eq.s32.totalorder %s14, 1
    %p53 = por %p51, %p52
    %p54 = scmp.ne.s32.totalorder %s45, %s46
    %p55 = scmp.eq.s32.totalorder %s14, 0
    %p56 = por %p54, %p55
    %p57 = scmp.ne.s32.totalorder %s45, %s46
    %p58 = scmp.eq.s32.totalorder %s15, 1
    %p59 = por %p57, %p58
    %p61 = scmp.ne.s32.totalorder %s46, %s60
    %p62 = scmp.eq.s32.totalorder %s15, 0
    %p63 = por %p61, %p62
    %s65 = sadd.s32 %s64, 1
    %p68 = scmp.eq.s32.totalorder %s9, 1
    %p69 = scmp.ne.s32.totalorder %s64, %s66
    %p70 = scmp.eq.s32.totalorder %s9, 0
    %p71 = por %p69, %p70
    %p72 = scmp.ne.s32.totalorder %s64, %s66
    %p73 = scmp.eq.s32.totalorder %s14, 1
    %p74 = por %p72, %p73
    %p75 = scmp.ne.s32.totalorder %s66, %s67
    %p76 = scmp.eq.s32.totalorder %s14, 0
    %p77 = por %p75, %p76
    %p78 = scmp.ne.s32.totalorder %s66, %s67
    %p79 = scmp.eq.s32.totalorder %s15, 1
    %p80 = por %p78, %p79
    %p82 = scmp.ne.s32.totalorder %s67, %s81
    %p83 = scmp.eq.s32.totalorder %s15, 0
    %p84 = por %p82, %p83
    %s85 = ssub.s32 %s9, %s16
    %p86 = scmp.eq.s32.totalorder %s85, 0
    %s88 = sadd.s32 %s87, 1
    %s89 = scalar_select %p86, %s87, %s88
    %p92 = pneg %p86
    %p93 = scmp.eq.s32.totalorder %s9, 1
    %p94 = por %p92, %p93
    %p95 = scmp.ne.s32.totalorder %s87, %s90
    %p96 = scmp.eq.s32.totalorder %s9, 0
    %p97 = por %p95, %p96
    %p98 = scmp.ne.s32.totalorder %s87, %s90
    %p99 = scmp.eq.s32.totalorder %s14, 1
    %p100 = por %p98, %p99
    %p101 = scmp.ne.s32.totalorder %s90, %s91
    %p102 = scmp.eq.s32.totalorder %s14, 0
    %p103 = por %p101, %p102
    %p104 = scmp.ne.s32.totalorder %s90, %s91
    %p105 = scmp.eq.s32.totalorder %s15, 1
    %p106 = por %p104, %p105
    %p108 = scmp.ne.s32.totalorder %s91, %s107
    %p109 = scmp.eq.s32.totalorder %s15, 0
    %p110 = por %p108, %p109
    %p111 = scmp.le.s32.totalorder 1, %s9
    %p112 = scmp.lt.s32.totalorder %s9, 3
    %p113 = pnand %p111, %p112
    %p114 = pneg %p113
    // Predicated region
    $region9: #{tpu_custom_call.1} parent=5 // pred_check
      _
    $region10: #{tpu_custom_call.1} parent=5 // pred_check_branch
      %116 = sbr.rel (%p113) target = $region12
    $region11: #{tpu_custom_call.1} parent=5 // pred_region
      %s117 = ssub.s32 %s9, 1
      // Predicated region
      $region13: #{tpu_custom_call.1} parent=11 // pred_check
        %p118 = pneg %p56
      $region14: #{tpu_custom_call.1} parent=11 // pred_check_branch
        %120 = sbr.rel (%p118) target = $region16
      $region15: #{tpu_custom_call.1} parent=11 // pred_region
        _
      $region16: #{tpu_custom_call.1} parent=11 // pred_fallthru
        _
      // Predicated region
      $region17: #{tpu_custom_call.1} parent=11 // pred_check
        %p121 = pneg %p77
      $region18: #{tpu_custom_call.1} parent=11 // pred_check_branch
        %123 = sbr.rel (%p121) target = $region20
      $region19: #{tpu_custom_call.1} parent=11 // pred_region
        _
      $region20: #{tpu_custom_call.1} parent=11 // pred_fallthru
        _
    $region12: #{tpu_custom_call.1} parent=5 // pred_fallthru
      _
    %p124 = scmp.lt.s32.totalorder %s9, 2
    // Predicated region
    $region21: #{tpu_custom_call.1} parent=5 // pred_check
      %p125 = pneg %p124
    $region22: #{tpu_custom_call.1} parent=5 // pred_check_branch
      %127 = sbr.rel (%p125) target = $region24
    $region23: #{tpu_custom_call.1} parent=5 // pred_region
      // Predicated region
      $region25: #{tpu_custom_call.1} parent=23 // pred_check
        %p128 = pneg %p29
      $region26: #{tpu_custom_call.1} parent=23 // pred_check_branch
        %130 = sbr.rel (%p128) target = $region28
      $region27: #{tpu_custom_call.1} parent=23 // pred_region
        %p131 = scmp.lt.s32.totalorder %s9, 1
        %s132 = scalar_select %p131, %s9, 1
        %s133 = smul.addr %s132, 32
        %s134 = smul.addr %s133, 8
        %s135 = scalar_lea.vmem %s0, %s134
      $region28: #{tpu_custom_call.1} parent=23 // pred_fallthru
        _
    $region24: #{tpu_custom_call.1} parent=5 // pred_fallthru
      _
    %p136 = scmp.le.s32.totalorder 1, %s9
    %p137 = scmp.lt.s32.totalorder %s9, 3
    %p138 = pnand %p136, %p137
    %p139 = pneg %p138
    // Predicated region
    $region29: #{tpu_custom_call.1} parent=5 // pred_check
      _
    $region30: #{tpu_custom_call.1} parent=5 // pred_check_branch
      %141 = sbr.rel (%p138) target = $region32
    $region31: #{tpu_custom_call.1} parent=5 // pred_region
      %s142 = ssub.s32 %s9, 1
      %p143 = scmp.lt.s32.totalorder %s14, 1
      %s144 = scalar_select %p143, %s14, 1
      %s145 = smul.addr %s144, 32
      %s146 = smul.addr %s145, 8
      %s147 = scalar_lea.vmem %s0, %s146
      %p148 = pneg %p35
      %p149 = pneg %p32
      %p150 = pneg %p56
      %p151 = pneg %p53
      %p152 = pneg %p77
      %p153 = pneg %p74
      %p154 = pneg %p103
      %p155 = pneg %p100
      %p156 = scmp.lt.s32.totalorder %s14, 1
      %s157 = scalar_select %p156, %s14, 1
      %s158 = smul.addr %s157, 32
      %s159 = smul.addr %s158, 8
      %s160 = scalar_lea.vmem %s3, %s159
      %p161 = scmp.lt.s32.totalorder %s14, 1
      %s162 = scalar_select %p161, %s14, 1
      %s163 = smul.addr %s162, 32
      %s164 = smul.addr %s163, 8
      %s165 = scalar_lea.vmem %s0, %s164
      %p166 = scmp.lt.s32.totalorder %s14, 1
      %s167 = scalar_select %p166, %s14, 1
      %s168 = smul.addr %s167, 32
      %s169 = smul.addr %s168, 8
      %s170 = scalar_lea.vmem %s3, %s169
      %v171 = vld [vmem:[%s165] sm:$0xff]
      %v172 = vld [vmem:[%s165 + $0x8] sm:$0xff]
      %v173 = vld [vmem:[%s165 + $0x10] sm:$0xff]
      %v174 = vld [vmem:[%s165 + $0x18] sm:$0xff]
      %v175 = vld [vmem:[%s165 + $0x20] sm:$0xff]
      %v176 = vld [vmem:[%s165 + $0x28] sm:$0xff]
      %v177 = vld [vmem:[%s165 + $0x30] sm:$0xff]
      %v178 = vld [vmem:[%s165 + $0x38] sm:$0xff]
      %v179 = vld [vmem:[%s165 + $0x40] sm:$0xff]
      %v180 = vld [vmem:[%s165 + $0x48] sm:$0xff]
      %v181 = vld [vmem:[%s165 + $0x50] sm:$0xff]
      %v182 = vld [vmem:[%s165 + $0x58] sm:$0xff]
      %v183 = vld [vmem:[%s165 + $0x60] sm:$0xff]
      %v184 = vld [vmem:[%s165 + $0x68] sm:$0xff]
      %v185 = vld [vmem:[%s165 + $0x70] sm:$0xff]
      %v186 = vld [vmem:[%s165 + $0x78] sm:$0xff]
      %v187 = vld [vmem:[%s165 + $0x80] sm:$0xff]
      %v188 = vld [vmem:[%s165 + $0x88] sm:$0xff]
      %v189 = vld [vmem:[%s165 + $0x90] sm:$0xff]
      %v190 = vld [vmem:[%s165 + $0x98] sm:$0xff]
      %v191 = vld [vmem:[%s165 + $0xa0] sm:$0xff]
      %v192 = vld [vmem:[%s165 + $0xa8] sm:$0xff]
      %v193 = vld [vmem:[%s165 + $0xb0] sm:$0xff]
      %v194 = vld [vmem:[%s165 + $0xb8] sm:$0xff]
      %v195 = vld [vmem:[%s165 + $0xc0] sm:$0xff]
      %v196 = vld [vmem:[%s165 + $0xc8] sm:$0xff]
      %v197 = vld [vmem:[%s165 + $0xd0] sm:$0xff]
      %v198 = vld [vmem:[%s165 + $0xd8] sm:$0xff]
      %v199 = vld [vmem:[%s165 + $0xe0] sm:$0xff]
      %v200 = vld [vmem:[%s165 + $0xe8] sm:$0xff]
      %v201 = vld [vmem:[%s165 + $0xf0] sm:$0xff]
      %v202 = vld [vmem:[%s165 + $0xf8] sm:$0xff]
      %vm203 = vcmask 31744
      %v204 = vsel %vm203, %v171, 0.0
      %v205 = vsel %vm203, %v172, 0.0
      %v206 = vadd.f32 %v204, %v205
      %v207 = vsel %vm203, %v173, 0.0
      %v208 = vadd.f32 %v206, %v207
      %v209 = vsel %vm203, %v174, 0.0
      %v210 = vadd.f32 %v208, %v209
      %v211 = vsel %vm203, %v175, 0.0
      %v212 = vadd.f32 %v210, %v211
      %v213 = vsel %vm203, %v176, 0.0
      %v214 = vadd.f32 %v212, %v213
      %v215 = vsel %vm203, %v177, 0.0
      %v216 = vadd.f32 %v214, %v215
      %v217 = vsel %vm203, %v178, 0.0
      %v218 = vadd.f32 %v216, %v217
      %v219 = vsel %vm203, %v179, 0.0
      %v220 = vadd.f32 %v218, %v219
      %v221 = vsel %vm203, %v180, 0.0
      %v222 = vadd.f32 %v220, %v221
      %v223 = vsel %vm203, %v181, 0.0
      %v224 = vadd.f32 %v222, %v223
      %v225 = vsel %vm203, %v182, 0.0
      %v226 = vadd.f32 %v224, %v225
      %v227 = vsel %vm203, %v183, 0.0
      %v228 = vadd.f32 %v226, %v227
      %v229 = vsel %vm203, %v184, 0.0
      %v230 = vadd.f32 %v228, %v229
      %v231 = vsel %vm203, %v185, 0.0
      %v232 = vadd.f32 %v230, %v231
      %v233 = vsel %vm203, %v186, 0.0
      %v234 = vadd.f32 %v232, %v233
      %v235 = vsel %vm203, %v187, 0.0
      %v236 = vadd.f32 %v234, %v235
      %v237 = vsel %vm203, %v188, 0.0
      %v238 = vadd.f32 %v236, %v237
      %v239 = vsel %vm203, %v189, 0.0
      %v240 = vadd.f32 %v238, %v239
      %v241 = vsel %vm203, %v190, 0.0
      %v242 = vadd.f32 %v240, %v241
      %v243 = vsel %vm203, %v191, 0.0
      %v244 = vadd.f32 %v242, %v243
      %v245 = vsel %vm203, %v192, 0.0
      %v246 = vadd.f32 %v244, %v245
      %v247 = vsel %vm203, %v193, 0.0
      %v248 = vadd.f32 %v246, %v247
      %v249 = vsel %vm203, %v194, 0.0
      %v250 = vadd.f32 %v248, %v249
      %v251 = vsel %vm203, %v195, 0.0
      %v252 = vadd.f32 %v250, %v251
      %v253 = vsel %vm203, %v196, 0.0
      %v254 = vadd.f32 %v252, %v253
      %v255 = vsel %vm203, %v197, 0.0
      %v256 = vadd.f32 %v254, %v255
      %v257 = vsel %vm203, %v198, 0.0
      %v258 = vadd.f32 %v256, %v257
      %v259 = vsel %vm203, %v199, 0.0
      %v260 = vadd.f32 %v258, %v259
      %v261 = vsel %vm203, %v200, 0.0
      %v262 = vadd.f32 %v260, %v261
      %v263 = vsel %vm203, %v201, 0.0
      %v264 = vadd.f32 %v262, %v263
      %v265 = vsel %vm203, %v202, 0.0
      %v266 = vadd.f32 %v264, %v265
      %v267 = vrot.slane %v266, 4
      %v268 = vadd.f32 %v266, %v267
      %v269 = vrot.slane %v268, 2
      %v270 = vadd.f32 %v268, %v269
      %v271 = vrot.slane %v270, 1
      %v272 = vadd.f32 %v270, %v271
      %v273 = vmul.f32 %v272, 0.00390625
      %v274 = vld [vmem:[%s1] sm:$0xf]
      %v276 = vsel %vm203, %v273, 0
      %vm278 = vcmask 1043456
      %v280 = vsel %vm278, %v274, 0
      %282 = vmatprep.subr.mxu0 0.0
      %283 = vmatpush1.msra.mxu0 %v280
      %284 = vmatprep.subr.mxu0 0.0
      %285 = vmatpush1.msra.mxu0 0.0
      %286 = vmatprep.subr.mxu0 0.0
      %287 = vmatpush1.msra.mxu0 0.0
      %288 = vmatprep.subr.mxu0 0.0
      %289 = vmatpush1.msra.mxu0 0.0
      %290 = vmatprep.subr.mxu0 0.0
      %291 = vmatpush1.msra.mxu0 0.0
      %292 = vmatprep.subr.mxu0 0.0
      %293 = vmatpush1.msra.mxu0 0.0
      %294 = vmatprep.subr.mxu0 0.0
      %295 = vmatpush1.msra.mxu0 0.0
      %296 = vmatprep.subr.mxu0 0.0
      %297 = vmatpush1.msra.mxu0 0.0
      %298 = vmatprep.subr.mxu0 0.0
      %299 = vmatpush1.msra.mxu0 0.0
      %300 = vmatprep.subr.mxu0 0.0
      %301 = vmatpush1.msra.mxu0 0.0
      %302 = vmatprep.subr.mxu0 0.0
      %303 = vmatpush1.msra.mxu0 0.0
      %304 = vmatprep.subr.mxu0 0.0
      %305 = vmatpush1.msra.mxu0 0.0
      %306 = vmatprep.subr.mxu0 0.0
      %307 = vmatpush1.msra.mxu0 0.0
      %308 = vmatprep.subr.mxu0 0.0
      %309 = vmatpush1.msra.mxu0 0.0
      %310 = vmatprep.subr.mxu0 0.0
      %311 = vmatpush1.msra.mxu0 0.0
      %312 = vmatprep.subr.mxu0 0.0
      %313 = vmatpush1.msra.mxu0 0.0
      %314 = vmatprep.subr.mxu0 0.0
      %315 = vmatpush1.msra.mxu0 0.0
      %316 = vmatprep.subr.mxu0 0.0
      %317 = vmatpush1.msra.mxu0 0.0
      %318 = vmatprep.subr.mxu0 0.0
      %319 = vmatpush1.msra.mxu0 0.0
      %320 = vmatprep.subr.mxu0 0.0
      %321 = vmatpush1.msra.mxu0 0.0
      %322 = vmatprep.subr.mxu0 0.0
      %323 = vmatpush1.msra.mxu0 0.0
      %324 = vmatprep.subr.mxu0 0.0
      %325 = vmatpush1.msra.mxu0 0.0
      %326 = vmatprep.subr.mxu0 0.0
      %327 = vmatpush1.msra.mxu0 0.0
      %328 = vmatprep.subr.mxu0 0.0
      %329 = vmatpush1.msra.mxu0 0.0
      %330 = vmatprep.subr.mxu0 0.0
      %331 = vmatpush1.msra.mxu0 0.0
      %332 = vmatprep.subr.mxu0 0.0
      %333 = vmatpush1.msra.mxu0 0.0
      %334 = vmatprep.subr.mxu0 0.0
      %335 = vmatpush1.msra.mxu0 0.0
      %336 = vmatprep.subr.mxu0 0.0
      %337 = vmatpush1.msra.mxu0 0.0
      %338 = vmatprep.subr.mxu0 0.0
      %339 = vmatpush1.msra.mxu0 0.0
      %340 = vmatprep.subr.mxu0 0.0
      %341 = vmatpush1.msra.mxu0 0.0
      %342 = vmatprep.subr.mxu0 0.0
      %343 = vmatpush1.msra.mxu0 0.0
      %344 = vmatprep.subr.mxu0 0.0
      %345 = vmatpush1.msra.mxu0 0.0
      %346 = vmatprep.mubr.f32.mxu0 0.0
      %347 = vmatmul.mubr.f32.gmra.mrb[0].mxu0 %v276
      %v348 = vpop.f32.mrb[0].mxu0
      %v349 = vadd.f32 0.0, %v348
      %v350 = vpop.f32.mrb[0].mxu0
      %351 = vdwg.mxu0
      %v352 = vxor.u32 %v349, 2147483648
      %v353 = vmul.f32 %v352, 1.442695
      %v354 = vpow.pop %v353
      %v355 = vadd.f32 %v354, 1.0
      %v356 = vrcp.pop %v355
      %v357 = vmul.f32 1.0, %v356
      %v358 = vmul.f32 %v349, %v357
      %v359 = vld [vmem:[%s2] sm:$0x3]
      %vm360 = vcmask 15360
      %v362 = vsel %vm360, %v358, 0
      %vm364 = vcmask 1041408
      %v366 = vsel %vm364, %v359, 0
      %368 = vmatprep.subr.mxu0 0.0
      %369 = vmatpush1.msra.mxu0 %v366
      %370 = vmatprep.subr.mxu0 0.0
      %371 = vmatpush1.msra.mxu0 0.0
      %372 = vmatprep.subr.mxu0 0.0
      %373 = vmatpush1.msra.mxu0 0.0
      %374 = vmatprep.subr.mxu0 0.0
      %375 = vmatpush1.msra.mxu0 0.0
      %376 = vmatprep.subr.mxu0 0.0
      %377 = vmatpush1.msra.mxu0 0.0
      %378 = vmatprep.subr.mxu0 0.0
      %379 = vmatpush1.msra.mxu0 0.0
      %380 = vmatprep.subr.mxu0 0.0
      %381 = vmatpush1.msra.mxu0 0.0
      %382 = vmatprep.subr.mxu0 0.0
      %383 = vmatpush1.msra.mxu0 0.0
      %384 = vmatprep.subr.mxu0 0.0
      %385 = vmatpush1.msra.mxu0 0.0
      %386 = vmatprep.subr.mxu0 0.0
      %387 = vmatpush1.msra.mxu0 0.0
      %388 = vmatprep.subr.mxu0 0.0
      %389 = vmatpush1.msra.mxu0 0.0
      %390 = vmatprep.subr.mxu0 0.0
      %391 = vmatpush1.msra.mxu0 0.0
      %392 = vmatprep.subr.mxu0 0.0
      %393 = vmatpush1.msra.mxu0 0.0
      %394 = vmatprep.subr.mxu0 0.0
      %395 = vmatpush1.msra.mxu0 0.0
      %396 = vmatprep.subr.mxu0 0.0
      %397 = vmatpush1.msra.mxu0 0.0
      %398 = vmatprep.subr.mxu0 0.0
      %399 = vmatpush1.msra.mxu0 0.0
      %400 = vmatprep.subr.mxu0 0.0
      %401 = vmatpush1.msra.mxu0 0.0
      %402 = vmatprep.subr.mxu0 0.0
      %403 = vmatpush1.msra.mxu0 0.0
      %404 = vmatprep.subr.mxu0 0.0
      %405 = vmatpush1.msra.mxu0 0.0
      %406 = vmatprep.subr.mxu0 0.0
      %407 = vmatpush1.msra.mxu0 0.0
      %408 = vmatprep.subr.mxu0 0.0
      %409 = vmatpush1.msra.mxu0 0.0
      %410 = vmatprep.subr.mxu0 0.0
      %411 = vmatpush1.msra.mxu0 0.0
      %412 = vmatprep.subr.mxu0 0.0
      %413 = vmatpush1.msra.mxu0 0.0
      %414 = vmatprep.subr.mxu0 0.0
      %415 = vmatpush1.msra.mxu0 0.0
      %416 = vmatprep.subr.mxu0 0.0
      %417 = vmatpush1.msra.mxu0 0.0
      %418 = vmatprep.subr.mxu0 0.0
      %419 = vmatpush1.msra.mxu0 0.0
      %420 = vmatprep.subr.mxu0 0.0
      %421 = vmatpush1.msra.mxu0 0.0
      %422 = vmatprep.subr.mxu0 0.0
      %423 = vmatpush1.msra.mxu0 0.0
      %424 = vmatprep.subr.mxu0 0.0
      %425 = vmatpush1.msra.mxu0 0.0
      %426 = vmatprep.subr.mxu0 0.0
      %427 = vmatpush1.msra.mxu0 0.0
      %428 = vmatprep.subr.mxu0 0.0
      %429 = vmatpush1.msra.mxu0 0.0
      %430 = vmatprep.subr.mxu0 0.0
      %431 = vmatpush1.msra.mxu0 0.0
      %432 = vmatprep.mubr.f32.mxu0 0.0
      %433 = vmatmul.mubr.f32.gmra.mrb[0].mxu0 %v362
      %v434 = vpop.f32.mrb[0].mxu0
      %v435 = vadd.f32 0.0, %v434
      %v436 = vpop.f32.mrb[0].mxu0
      %437 = vdwg.mxu0
      %v438 = vxor.u32 %v435, 2147483648
      %v439 = vmul.f32 %v438, 1.442695
      %v440 = vpow.pop %v439
      %v441 = vadd.f32 %v440, 1.0
      %v442 = vrcp.pop %v441
      %v443 = vmul.f32 1.0, %v442
      %v444 = vlaneseq
      %v445 = vshrl.u32 %v444, 7
      %v446 = vsub.s32 0, %v445
      %v447 = vrot.slane %v443, %v446
      %v448 = vmul.f32 %v171, %v447
      %v449 = vmul.f32 %v172, %v447
      %v450 = vmul.f32 %v173, %v447
      %v451 = vmul.f32 %v174, %v447
      %v452 = vmul.f32 %v175, %v447
      %v453 = vmul.f32 %v176, %v447
      %v454 = vmul.f32 %v177, %v447
      %v455 = vmul.f32 %v178, %v447
      %v456 = vmul.f32 %v179, %v447
      %v457 = vmul.f32 %v180, %v447
      %v458 = vmul.f32 %v181, %v447
      %v459 = vmul.f32 %v182, %v447
      %v460 = vmul.f32 %v183, %v447
      %v461 = vmul.f32 %v184, %v447
      %v462 = vmul.f32 %v185, %v447
      %v463 = vmul.f32 %v186, %v447
      %v464 = vmul.f32 %v187, %v447
      %v465 = vmul.f32 %v188, %v447
      %v466 = vmul.f32 %v189, %v447
      %v467 = vmul.f32 %v190, %v447
      %v468 = vmul.f32 %v191, %v447
      %v469 = vmul.f32 %v192, %v447
      %v470 = vmul.f32 %v193, %v447
      %v471 = vmul.f32 %v194, %v447
      %v472 = vmul.f32 %v195, %v447
      %v473 = vmul.f32 %v196, %v447
      %v474 = vmul.f32 %v197, %v447
      %v475 = vmul.f32 %v198, %v447
      %v476 = vmul.f32 %v199, %v447
      %v477 = vmul.f32 %v200, %v447
      %v478 = vmul.f32 %v201, %v447
      %v479 = vmul.f32 %v202, %v447
      %480 = vst.msk [vmem:[%s170] sm:$0xff] %vm203, %v448
      %481 = vst.msk [vmem:[%s170 + $0x8] sm:$0xff] %vm203, %v449
      %482 = vst.msk [vmem:[%s170 + $0x10] sm:$0xff] %vm203, %v450
      %483 = vst.msk [vmem:[%s170 + $0x18] sm:$0xff] %vm203, %v451
      %484 = vst.msk [vmem:[%s170 + $0x20] sm:$0xff] %vm203, %v452
      %485 = vst.msk [vmem:[%s170 + $0x28] sm:$0xff] %vm203, %v453
      %486 = vst.msk [vmem:[%s170 + $0x30] sm:$0xff] %vm203, %v454
      %487 = vst.msk [vmem:[%s170 + $0x38] sm:$0xff] %vm203, %v455
      %488 = vst.msk [vmem:[%s170 + $0x40] sm:$0xff] %vm203, %v456
      %489 = vst.msk [vmem:[%s170 + $0x48] sm:$0xff] %vm203, %v457
      %490 = vst.msk [vmem:[%s170 + $0x50] sm:$0xff] %vm203, %v458
      %491 = vst.msk [vmem:[%s170 + $0x58] sm:$0xff] %vm203, %v459
      %492 = vst.msk [vmem:[%s170 + $0x60] sm:$0xff] %vm203, %v460
      %493 = vst.msk [vmem:[%s170 + $0x68] sm:$0xff] %vm203, %v461
      %494 = vst.msk [vmem:[%s170 + $0x70] sm:$0xff] %vm203, %v462
      %495 = vst.msk [vmem:[%s170 + $0x78] sm:$0xff] %vm203, %v463
      %496 = vst.msk [vmem:[%s170 + $0x80] sm:$0xff] %vm203, %v464
      %497 = vst.msk [vmem:[%s170 + $0x88] sm:$0xff] %vm203, %v465
      %498 = vst.msk [vmem:[%s170 + $0x90] sm:$0xff] %vm203, %v466
      %499 = vst.msk [vmem:[%s170 + $0x98] sm:$0xff] %vm203, %v467
      %500 = vst.msk [vmem:[%s170 + $0xa0] sm:$0xff] %vm203, %v468
      %501 = vst.msk [vmem:[%s170 + $0xa8] sm:$0xff] %vm203, %v469
      %502 = vst.msk [vmem:[%s170 + $0xb0] sm:$0xff] %vm203, %v470
      %503 = vst.msk [vmem:[%s170 + $0xb8] sm:$0xff] %vm203, %v471
      %504 = vst.msk [vmem:[%s170 + $0xc0] sm:$0xff] %vm203, %v472
      %505 = vst.msk [vmem:[%s170 + $0xc8] sm:$0xff] %vm203, %v473
      %506 = vst.msk [vmem:[%s170 + $0xd0] sm:$0xff] %vm203, %v474
      %507 = vst.msk [vmem:[%s170 + $0xd8] sm:$0xff] %vm203, %v475
      %508 = vst.msk [vmem:[%s170 + $0xe0] sm:$0xff] %vm203, %v476
      %509 = vst.msk [vmem:[%s170 + $0xe8] sm:$0xff] %vm203, %v477
      %510 = vst.msk [vmem:[%s170 + $0xf0] sm:$0xff] %vm203, %v478
      %511 = vst.msk [vmem:[%s170 + $0xf8] sm:$0xff] %vm203, %v479
      %p512 = scmp.lt.s32.totalorder %s14, 1
      %s513 = scalar_select %p512, %s14, 1
      %s514 = smul.addr %s513, 32
      %s515 = smul.addr %s514, 8
      %s516 = scalar_lea.vmem %s3, %s515
      // Predicated region
      $region33: #{tpu_custom_call.1} parent=31 // pred_check
        %p517 = pneg %p100
      $region34: #{tpu_custom_call.1} parent=31 // pred_check_branch
        %519 = sbr.rel (%p517) target = $region36
      $region35: #{tpu_custom_call.1} parent=31 // pred_region
        _
      $region36: #{tpu_custom_call.1} parent=31 // pred_fallthru
        _
    $region32: #{tpu_custom_call.1} parent=5 // pred_fallthru
      _
    %p520 = scmp.le.s32.totalorder 2, %s9
    // Predicated region
    $region37: #{tpu_custom_call.1} parent=5 // pred_check
      %p521 = pneg %p520
    $region38: #{tpu_custom_call.1} parent=5 // pred_check_branch
      %523 = sbr.rel (%p521) target = $region40
    $region39: #{tpu_custom_call.1} parent=5 // pred_region
      %s524 = ssub.s32 %s9, 2
      // Predicated region
      $region41: #{tpu_custom_call.1} parent=39 // pred_check
        %p525 = pneg %p106
      $region42: #{tpu_custom_call.1} parent=39 // pred_check_branch
        %527 = sbr.rel (%p525) target = $region44
      $region43: #{tpu_custom_call.1} parent=39 // pred_region
        %p528 = scmp.lt.s32.totalorder %s15, 1
        %s529 = scalar_select %p528, %s15, 1
        %s530 = smul.addr %s529, 32
        %s531 = smul.addr %s530, 8
        %s532 = scalar_lea.vmem %s3, %s531
      $region44: #{tpu_custom_call.1} parent=39 // pred_fallthru
        _
    $region40: #{tpu_custom_call.1} parent=5 // pred_fallthru
      _
  $region6: #{tpu_custom_call.1} parent=0 // loop_footer
    %s13 = sadd.s32 1, %s9
  $region7: #{tpu_custom_call.1} parent=0 // loop_footer_branch
    %8 = sbr.rel target = $region3
  $region8: #{tpu_custom_call.1} parent=0 // loop_exit
    _

</llo_original>
